<compile_context>
chip_gen: v5e
topology: v5e:2x2
jax: 0.10.0
libtpu: 0.0.40
codegen_flags: <defaults>
</compile_context>

<pallas_src>
import functools

import jax
import jax.numpy as jnp
import numpy as np
from jax.experimental import pallas as pl
from jax.experimental.pallas import tpu as pltpu

LN_EPS = 1e-5  # F.layer_norm default


# ---------------------------------------------------------------------------
# small helpers
# ---------------------------------------------------------------------------
def _round_up(x, m):
    return (x + m - 1) // m * m


def _device_kind():
    try:
        return jax.devices()[0].device_kind.lower()
    except Exception:  # pragma: no cover
        return ""


def _vmem_capacity_bytes(kind):
    try:
        return int(pltpu.get_tpu_info().vmem_capacity_bytes)
    except Exception:
        if "v7" in kind:
            return 64 * 1024 * 1024
        return 128 * 1024 * 1024


def _vmem_cost(tm, tf, d):
    """Approximate VMEM footprint (bytes) of one pipelined step."""
    dbl = 2  # double buffering
    io = dbl * (tm * d * 4        # x block (f32)
                + tm * d * 4      # out block (f32, resident accumulator)
                + d * tf * 2      # W1 chunk (bf16)
                + tf * 4          # b1 chunk (f32)
                + tf * d * 2      # W2 chunk (bf16)
                + 2 * d * 4)      # gamma + b2
    scratch = tm * d * 2          # cached LayerNorm(x), bf16
    temps = tm * tf * 8           # f32 pre-activation + GELU temporaries
    return io + scratch + temps


def _pick_tiles(m, d, ffi_pad, budget, want_two_row_tiles):
    """Largest (tm, tf) fitting the VMEM budget; tm is prioritized (weight reuse)."""
    m8 = _round_up(m, 8)
    tm_cands = [t for t in (1024, 512, 256, 128, 64, 32, 16, 8) if t <= m8]
    if not tm_cands:
        tm_cands = [m8]
    if want_two_row_tiles and m8 >= 16:
        # ensure grid[0] >= 2 so both v7x TensorCores get work
        half = _round_up(m8 // 2, 8)
        capped = [t for t in tm_cands if t <= half]
        tm_cands = capped if capped else [half]
    tf_cands = [t for t in (4096, 2048, 1024, 512, 256, 128)
                if t <= ffi_pad and ffi_pad % t == 0]
    if not tf_cands:
        tf_cands = [ffi_pad]
    for tm in tm_cands:
        for tf in tf_cands:
            if _vmem_cost(tm, tf, d) <= budget:
                return tm, tf
    return tm_cands[-1], tf_cands[-1]


# ---------------------------------------------------------------------------
# in-kernel math
# ---------------------------------------------------------------------------
def _gelu_tanh(x, compute_dtype):
    # tanh-approx GELU (PyTorch nn.GELU(approximate='tanh') formula).  tanh
    # lands on the EUP slot; polynomial in bf16 on v6e/v7x, f32 on v5e.
    x = x.astype(compute_dtype)
    c0 = jnp.asarray(0.7978845608028654, compute_dtype)   # sqrt(2/pi)
    c1 = jnp.asarray(0.044715, compute_dtype)
    inner = c0 * (x + c1 * x * x * x)
    y = 0.5 * x * (1.0 + jnp.tanh(inner))
    return y.astype(jnp.bfloat16)                           # MXU input dtype


# ---------------------------------------------------------------------------
# Pallas kernel: grid = (row_tiles [parallel], ffi_tiles [arbitrary, reduction])
# ---------------------------------------------------------------------------
def feed_forward_kernel(x_ref, g_ref, w1_ref, b1_ref, w2_ref, b2_ref,
                        o_ref, xn_ref, *, compute_dtype):
    j = pl.program_id(1)

    @pl.when(j == 0)
    def _init():
        # LayerNorm in f32, computed once per row tile, cached in bf16 for the
        # MXU; output accumulator (resident f32 VMEM block) zeroed.
        x = x_ref[...]                                       # (tm, D) f32
        mu = jnp.mean(x, axis=-1, keepdims=True)
        var = jnp.mean((x - mu) * (x - mu), axis=-1, keepdims=True)
        xn = (x - mu) * jax.lax.rsqrt(var + LN_EPS) * g_ref[...]
        xn_ref[...] = xn.astype(jnp.bfloat16)
        o_ref[...] = jnp.zeros_like(o_ref)

    # ffi chunk: h = gelu(xn @ W1[:, j] + b1[j]);  out += h @ W2[j, :]
    h = jnp.dot(xn_ref[...], w1_ref[...], preferred_element_type=jnp.float32)
    h = h + b1_ref[...]
    h = _gelu_tanh(h, compute_dtype)                         # -> bf16
    o_ref[...] += jnp.dot(h, w2_ref[...], preferred_element_type=jnp.float32)

    @pl.when(j == pl.num_programs(1) - 1)
    def _finalize():
        o_ref[...] += b2_ref[...]


# ---------------------------------------------------------------------------
# one-time parameter prep (hoisted out of the per-call path)
# ---------------------------------------------------------------------------
def prepare_ffn_params(params):
    """Cast W1/W2 to bf16 once and zero-pad the hidden dim to a multiple of 128.

    Zero padding is exact: gelu(0 + 0) == 0 and the padded W2 rows are zero,
    so padded hidden units contribute nothing to the output.
    """
    d, ffi = params["w1"].shape
    ffi_pad = _round_up(max(ffi, 128), 128)
    pad = ffi_pad - ffi
    w1, b1, w2 = params["w1"], params["b1"], params["w2"]
    if pad:
        w1 = jnp.pad(w1, ((0, 0), (0, pad)))
        b1 = jnp.pad(b1, ((0, 0), (0, pad)))
        w2 = jnp.pad(w2, ((0, pad), (0, 0)))
    return dict(
        gamma=params["gamma"].astype(jnp.float32),
        w1=w1.astype(jnp.bfloat16),
        b1=b1.astype(jnp.float32),
        w2=w2.astype(jnp.bfloat16),
        b2=params["b2"].astype(jnp.float32),
    )


# ---------------------------------------------------------------------------
# wrapper
# ---------------------------------------------------------------------------
def feed_forward(x, p):
    b, n, d = x.shape
    m = b * n
    ffi_pad = p["w1"].shape[1]

    kind = _device_kind()
    is_v7 = "v7" in kind
    use_bf16_gelu = ("v6" in kind) or is_v7   # bf16 VALU only on v6e/v7x

    cap = _vmem_capacity_bytes(kind)
    if cap <= 64 * 1024 * 1024:
        # v7x-class: 64 MiB is the whole physical VMEM; leave headroom.
        vmem_limit = min(cap, 56 * 1024 * 1024)
    else:
        # v5e / v6e: 128 MiB physical; raise above the scoped default.
        vmem_limit = min(cap - 16 * 1024 * 1024, 112 * 1024 * 1024)
    budget = int(vmem_limit * 0.85)

    tm, tf = _pick_tiles(m, d, ffi_pad, budget, want_two_row_tiles=is_v7)
    m_pad = _round_up(m, tm)

    x2 = x.reshape(m, d).astype(jnp.float32)
    if m_pad != m:
        x2 = jnp.pad(x2, ((0, m_pad - m), (0, 0)))

    grid = (m_pad // tm, ffi_pad // tf)
    kernel = functools.partial(
        feed_forward_kernel,
        compute_dtype=jnp.bfloat16 if use_bf16_gelu else jnp.float32)

    out = pl.pallas_call(
        kernel,
        out_shape=jax.ShapeDtypeStruct((m_pad, d), jnp.float32),
        grid_spec=pltpu.PrefetchScalarGridSpec(
            num_scalar_prefetch=0,
            grid=grid,
            in_specs=[
                pl.BlockSpec((tm, d), lambda i, j: (i, 0)),    # x rows
                pl.BlockSpec((1, d), lambda i, j: (0, 0)),     # LN gamma
                pl.BlockSpec((d, tf), lambda i, j: (0, j)),    # W1 chunk (bf16)
                pl.BlockSpec((1, tf), lambda i, j: (0, j)),    # b1 chunk
                pl.BlockSpec((tf, d), lambda i, j: (j, 0)),    # W2 chunk (bf16)
                pl.BlockSpec((1, d), lambda i, j: (0, 0)),     # b2
            ],
            out_specs=pl.BlockSpec((tm, d), lambda i, j: (i, 0)),
            scratch_shapes=[
                pltpu.VMEM((tm, d), jnp.bfloat16),   # cached LayerNorm(x)
            ],
        ),
        compiler_params=pltpu.CompilerParams(
            dimension_semantics=("parallel", "arbitrary"),
            vmem_limit_bytes=int(vmem_limit),
        ),
    )(x2, p["gamma"], p["w1"], p["b1"], p["w2"], p["b2"])

    if m_pad != m:
        out = out[:m]
    return out.reshape(b, n, d)


# ---------------------------------------------------------------------------
# deterministic parameter init (shapes follow the PyTorch __init__)
# ---------------------------------------------------------------------------
def init_params(key, dim, mult=4):
    ffi = int(dim * mult)
    k1, k2, k3, k4 = jax.random.split(key, 4)
    return dict(
        gamma=jnp.ones((1, dim), jnp.float32),                 # LayerNorm gamma init = 1
        w1=0.05 * jax.random.normal(k1, (dim, ffi), jnp.float32),
        b1=0.02 * jax.random.normal(k2, (1, ffi), jnp.float32),
        w2=0.05 * jax.random.normal(k3, (ffi, dim), jnp.float32),
        b2=0.02 * jax.random.normal(k4, (1, dim), jnp.float32),
    )


# ---------------------------------------------------------------------------
# pure-JAX reference (mirrors the PyTorch forward: exact-erf GELU, f32)
# ---------------------------------------------------------------------------
def ref_feed_forward(x, p):
    mu = x.mean(-1, keepdims=True)
    var = ((x - mu) ** 2).mean(-1, keepdims=True)
    xn = (x - mu) / jnp.sqrt(var + LN_EPS) * p["gamma"][0]
    h = jax.nn.gelu(xn @ p["w1"] + p["b1"][0], approximate=False)
    return h @ p["w2"] + p["b2"][0]


def _run_case(key, b, n, dim, mult):
    key, kx = jax.random.split(key)
    x = jax.random.normal(kx, (b, n, dim), jnp.float32)
    params = init_params(key, dim, mult)
    ffp = prepare_ffn_params(params)            # one-time bf16 cast + ffi pad

    out = feed_forward(x, ffp)
    out = jax.block_until_ready(out)

    ref = ref_feed_forward(x, params)
    # bf16 MXU inputs / bf16 activations and tanh-approx GELU vs exact-erf f32
    # reference => loose tolerance.
    np.testing.assert_allclose(np.asarray(out), np.asarray(ref),
                               rtol=2e-2, atol=2e-2)


if __name__ == "__main__":
    key = jax.random.PRNGKey(0)

    # main case: batch=2, seq=8, dim=32, mult=4 -> inner=128
    _run_case(key, 2, 8, 32, 4)

    # padding path: rows (1*5) not a multiple of the tile, inner dim 96 -> 128
    _run_case(key, 1, 5, 32, 3)

    print("KERNEL_OK")
</pallas_src>

<mosaic_0001>
module attributes {stable_mosaic.version = 11 : i64} {
  func.func @feed_forward_kernel(%arg0: i32, %arg1: i32, %arg2: memref<16x32xf32, #tpu.memory_space<vmem>>, %arg3: memref<1x32xf32, #tpu.memory_space<vmem>>, %arg4: memref<32x128xbf16, #tpu.memory_space<vmem>>, %arg5: memref<1x128xf32, #tpu.memory_space<vmem>>, %arg6: memref<128x32xbf16, #tpu.memory_space<vmem>>, %arg7: memref<1x32xf32, #tpu.memory_space<vmem>>, %arg8: memref<16x32xf32, #tpu.memory_space<vmem>>, %arg9: memref<16x32xbf16, #tpu.memory_space<vmem>>) attributes {dimension_semantics = [#tpu.dimension_semantics<parallel>, #tpu.dimension_semantics<arbitrary>], iteration_bounds = array<i64: 1, 1>, scalar_prefetch = 0 : i64, scratch_operands = 1 : i64, tpu.core_type = #tpu.core_type<tc>, window_params = [{transform_indices = @transform_0, window_bounds = array<i64: 16, 32>}, {pipeline_mode = #tpu.pipeline_mode<synchronous>, transform_indices = @transform_1, window_bounds = array<i64: 1, 32>}, {transform_indices = @transform_2, window_bounds = array<i64: 32, 128>}, {transform_indices = @transform_3, window_bounds = array<i64: 1, 128>}, {transform_indices = @transform_4, window_bounds = array<i64: 128, 32>}, {pipeline_mode = #tpu.pipeline_mode<synchronous>, transform_indices = @transform_5, window_bounds = array<i64: 1, 32>}, {transform_indices = @transform_6, window_bounds = array<i64: 16, 32>}]} {
    %c0_i32 = arith.constant 0 : i32
    %0 = arith.cmpi eq, %arg1, %c0_i32 : i32
    %1 = arith.extui %0 : i1 to i32
    %c0_i32_0 = arith.constant 0 : i32
    %2 = arith.cmpi ne, %1, %c0_i32_0 : i32
    scf.if %2 {
      %c0_19 = arith.constant 0 : index
      %c0_20 = arith.constant 0 : index
      %31 = vector.load %arg2[%c0_19, %c0_20] : memref<16x32xf32, #tpu.memory_space<vmem>>, vector<16x32xf32>
      %cst_21 = arith.constant dense<0.000000e+00> : vector<16xf32>
      %32 = vector.multi_reduction <add>, %31, %cst_21 [1] : vector<16x32xf32> to vector<16xf32>
      %33 = vector.shape_cast %32 : vector<16xf32> to vector<16x1xf32>
      %cst_22 = arith.constant 3.200000e+01 : f32
      %34 = vector.broadcast %cst_22 : f32 to vector<16x1xf32>
      %35 = arith.divf %33, %34 : vector<16x1xf32>
      %36 = vector.broadcast %35 : vector<16x1xf32> to vector<16x32xf32>
      %37 = arith.subf %31, %36 : vector<16x32xf32>
      %38 = vector.broadcast %35 : vector<16x1xf32> to vector<16x32xf32>
      %39 = arith.subf %31, %38 : vector<16x32xf32>
      %40 = arith.mulf %37, %39 : vector<16x32xf32>
      %cst_23 = arith.constant dense<0.000000e+00> : vector<16xf32>
      %41 = vector.multi_reduction <add>, %40, %cst_23 [1] : vector<16x32xf32> to vector<16xf32>
      %42 = vector.shape_cast %41 : vector<16xf32> to vector<16x1xf32>
      %cst_24 = arith.constant 3.200000e+01 : f32
      %43 = vector.broadcast %cst_24 : f32 to vector<16x1xf32>
      %44 = arith.divf %42, %43 : vector<16x1xf32>
      %45 = vector.broadcast %35 : vector<16x1xf32> to vector<16x32xf32>
      %46 = arith.subf %31, %45 : vector<16x32xf32>
      %cst_25 = arith.constant 9.99999974E-6 : f32
      %47 = vector.broadcast %cst_25 : f32 to vector<16x1xf32>
      %48 = arith.addf %44, %47 : vector<16x1xf32>
      %49 = math.rsqrt %48 : vector<16x1xf32>
      %50 = vector.broadcast %49 : vector<16x1xf32> to vector<16x32xf32>
      %51 = arith.mulf %46, %50 : vector<16x32xf32>
      %c0_26 = arith.constant 0 : index
      %c0_27 = arith.constant 0 : index
      %52 = vector.load %arg3[%c0_26, %c0_27] : memref<1x32xf32, #tpu.memory_space<vmem>>, vector<1x32xf32>
      %53 = vector.broadcast %52 : vector<1x32xf32> to vector<16x32xf32>
      %54 = arith.mulf %51, %53 : vector<16x32xf32>
      %55 = arith.truncf %54 : vector<16x32xf32> to vector<16x32xbf16>
      %c0_28 = arith.constant 0 : index
      %c0_29 = arith.constant 0 : index
      %56 = vector.load %arg9[%c0_28, %c0_29] : memref<16x32xbf16, #tpu.memory_space<vmem>>, vector<16x32xbf16>
      tpu.vector_store %arg9[%c0_28, %c0_29], %55 {strides = array<i32>} : memref<16x32xbf16, #tpu.memory_space<vmem>>, vector<16x32xbf16>,
      %cst_30 = arith.constant 0.000000e+00 : f32
      %57 = vector.broadcast %cst_30 : f32 to vector<16x32xf32>
      %c0_31 = arith.constant 0 : index
      %c0_32 = arith.constant 0 : index
      %58 = vector.load %arg8[%c0_31, %c0_32] : memref<16x32xf32, #tpu.memory_space<vmem>>, vector<16x32xf32>
      tpu.vector_store %arg8[%c0_31, %c0_32], %57 {strides = array<i32>} : memref<16x32xf32, #tpu.memory_space<vmem>>, vector<16x32xf32>,
    } else {
    }
    %c0 = arith.constant 0 : index
    %c0_1 = arith.constant 0 : index
    %3 = vector.load %arg9[%c0, %c0_1] : memref<16x32xbf16, #tpu.memory_space<vmem>>, vector<16x32xbf16>
    %c0_2 = arith.constant 0 : index
    %c0_3 = arith.constant 0 : index
    %4 = vector.load %arg4[%c0_2, %c0_3] : memref<32x128xbf16, #tpu.memory_space<vmem>>, vector<32x128xbf16>
    %cst = arith.constant dense<0.000000e+00> : vector<16x128xf32>
    %5 = tpu.matmul %3, %4, %cst {dimension_numbers = #tpu.dot_dimension_numbers<[1], [0], [0], [1], [0, 0, 1, 1], [], []>} : vector<16x32xbf16>, vector<32x128xbf16>, vector<16x128xf32> -> vector<16x128xf32>
    %c0_4 = arith.constant 0 : index
    %c0_5 = arith.constant 0 : index
    %6 = vector.load %arg5[%c0_4, %c0_5] : memref<1x128xf32, #tpu.memory_space<vmem>>, vector<1x128xf32>
    %7 = vector.broadcast %6 : vector<1x128xf32> to vector<16x128xf32>
    %8 = arith.addf %5, %7 : vector<16x128xf32>
    %cst_6 = arith.constant 4.471500e-02 : f32
    %9 = vector.broadcast %cst_6 : f32 to vector<16x128xf32>
    %10 = arith.mulf %9, %8 : vector<16x128xf32>
    %11 = arith.mulf %10, %8 : vector<16x128xf32>
    %12 = arith.mulf %11, %8 : vector<16x128xf32>
    %13 = arith.addf %8, %12 : vector<16x128xf32>
    %cst_7 = arith.constant 0.797884583 : f32
    %14 = vector.broadcast %cst_7 : f32 to vector<16x128xf32>
    %15 = arith.mulf %14, %13 : vector<16x128xf32>
    %cst_8 = arith.constant 5.000000e-01 : f32
    %16 = vector.broadcast %cst_8 : f32 to vector<16x128xf32>
    %17 = arith.mulf %16, %8 : vector<16x128xf32>
    %18 = math.tanh %15 : vector<16x128xf32>
    %cst_9 = arith.constant 1.000000e+00 : f32
    %19 = vector.broadcast %cst_9 : f32 to vector<16x128xf32>
    %20 = arith.addf %19, %18 : vector<16x128xf32>
    %21 = arith.mulf %17, %20 : vector<16x128xf32>
    %22 = arith.truncf %21 : vector<16x128xf32> to vector<16x128xbf16>
    %c0_10 = arith.constant 0 : index
    %c0_11 = arith.constant 0 : index
    %23 = vector.load %arg8[%c0_10, %c0_11] : memref<16x32xf32, #tpu.memory_space<vmem>>, vector<16x32xf32>
    %c0_12 = arith.constant 0 : index
    %c0_13 = arith.constant 0 : index
    %24 = vector.load %arg6[%c0_12, %c0_13] : memref<128x32xbf16, #tpu.memory_space<vmem>>, vector<128x32xbf16>
    %cst_14 = arith.constant dense<0.000000e+00> : vector<16x32xf32>
    %25 = tpu.matmul %22, %24, %cst_14 {dimension_numbers = #tpu.dot_dimension_numbers<[1], [0], [0], [1], [0, 0, 1, 1], [], []>} : vector<16x128xbf16>, vector<128x32xbf16>, vector<16x32xf32> -> vector<16x32xf32>
    %26 = arith.addf %23, %25 : vector<16x32xf32>
    %c0_15 = arith.constant 0 : index
    %c0_16 = arith.constant 0 : index
    %27 = vector.load %arg8[%c0_15, %c0_16] : memref<16x32xf32, #tpu.memory_space<vmem>>, vector<16x32xf32>
    tpu.vector_store %arg8[%c0_15, %c0_16], %26 {strides = array<i32>} : memref<16x32xf32, #tpu.memory_space<vmem>>, vector<16x32xf32>,
    %c0_i32_17 = arith.constant 0 : i32
    %28 = arith.cmpi eq, %arg1, %c0_i32_17 : i32
    %29 = arith.extui %28 : i1 to i32
    %c0_i32_18 = arith.constant 0 : i32
    %30 = arith.cmpi ne, %29, %c0_i32_18 : i32
    scf.if %30 {
      %c0_19 = arith.constant 0 : index
      %c0_20 = arith.constant 0 : index
      %31 = vector.load %arg8[%c0_19, %c0_20] : memref<16x32xf32, #tpu.memory_space<vmem>>, vector<16x32xf32>
      %c0_21 = arith.constant 0 : index
      %c0_22 = arith.constant 0 : index
      %32 = vector.load %arg7[%c0_21, %c0_22] : memref<1x32xf32, #tpu.memory_space<vmem>>, vector<1x32xf32>
      %33 = vector.broadcast %32 : vector<1x32xf32> to vector<16x32xf32>
      %34 = arith.addf %31, %33 : vector<16x32xf32>
      %c0_23 = arith.constant 0 : index
      %c0_24 = arith.constant 0 : index
      %35 = vector.load %arg8[%c0_23, %c0_24] : memref<16x32xf32, #tpu.memory_space<vmem>>, vector<16x32xf32>
      tpu.vector_store %arg8[%c0_23, %c0_24], %34 {strides = array<i32>} : memref<16x32xf32, #tpu.memory_space<vmem>>, vector<16x32xf32>,
    } else {
    }
    return
  }
  func.func @transform_0(%arg0: i32, %arg1: i32) -> (i32, i32) {
    %c0_i32 = arith.constant 0 : i32
    %c0_i32_0 = arith.constant 0 : i32
    return %arg0, %c0_i32 : i32, i32
  }
  func.func @transform_1(%arg0: i32, %arg1: i32) -> (i32, i32) {
    %c0_i32 = arith.constant 0 : i32
    %c0_i32_0 = arith.constant 0 : i32
    %c0_i32_1 = arith.constant 0 : i32
    return %c0_i32, %c0_i32_0 : i32, i32
  }
  func.func @transform_2(%arg0: i32, %arg1: i32) -> (i32, i32) {
    %c0_i32 = arith.constant 0 : i32
    %c0_i32_0 = arith.constant 0 : i32
    return %c0_i32, %arg1 : i32, i32
  }
  func.func @transform_3(%arg0: i32, %arg1: i32) -> (i32, i32) {
    %c0_i32 = arith.constant 0 : i32
    %c0_i32_0 = arith.constant 0 : i32
    return %c0_i32, %arg1 : i32, i32
  }
  func.func @transform_4(%arg0: i32, %arg1: i32) -> (i32, i32) {
    %c0_i32 = arith.constant 0 : i32
    %c0_i32_0 = arith.constant 0 : i32
    return %arg1, %c0_i32 : i32, i32
  }
  func.func @transform_5(%arg0: i32, %arg1: i32) -> (i32, i32) {
    %c0_i32 = arith.constant 0 : i32
    %c0_i32_0 = arith.constant 0 : i32
    %c0_i32_1 = arith.constant 0 : i32
    return %c0_i32, %c0_i32_0 : i32, i32
  }
  func.func @transform_6(%arg0: i32, %arg1: i32) -> (i32, i32) {
    %c0_i32 = arith.constant 0 : i32
    %c0_i32_0 = arith.constant 0 : i32
    return %arg0, %c0_i32 : i32, i32
  }
}

</mosaic_0001>

<llo_original>
// kernel: tpu_custom_call.1
$region0: #{tpu_custom_call.1}
  #allocation0 [shape = 'u32[]', space=smem, size = 0x4, offset = 0x4, fixed_abs, tag = 'smem constant byte address 0x4 - core index']
  #allocation1 [shape = 'u32[72,128]{1,0:T(1,128)}', space=vmem, size = 0x9000, scoped, tag = 'internal scratch']
  #allocation2 [shape = 'bf16[16,32]{1,0:T(8,128)(2,1)}', space=vmem, size = 0x1000, scoped, tag = 'scratch operand']
  %s0 = inlined_call_operand.vmem [shape: f32[16,32], index: 0, kind: input, shape index: {}]
  %s1 = inlined_call_operand.vmem [shape: f32[1,32], index: 1, kind: input, shape index: {}]
  %s2 = inlined_call_operand.vmem [shape: bf16[32,128], index: 2, kind: input, shape index: {}]
  %s3 = inlined_call_operand.vmem [shape: f32[1,128], index: 3, kind: input, shape index: {}]
  %s4 = inlined_call_operand.vmem [shape: bf16[128,32], index: 4, kind: input, shape index: {}]
  %s5 = inlined_call_operand.vmem [shape: f32[1,32], index: 5, kind: input, shape index: {}]
  %s6 = inlined_call_operand.hbm [shape: f32[16,32], index: 6, kind: output, shape index: {}]
  %s7 = sld [smem:[#allocation0]]
  $region42: #{tpu_custom_call.1} parent=0
    _
  %s9 = ssub.s32 1, %s7
  %s10 = scalar_select 0, %s9, %s7
  $region1: #{tpu_custom_call.1} parent=0
    #allocation3 [shape = 'u8[8192]{0}', space=vmem, size = 0x2000, scoped, tag = 'output window, operand 0, single buffered']
    #allocation4 [shape = 's32[1]{0}', space=sflag, size = 0x4, scoped, tag = 'scoped memory for tpu_custom_call.1']
    %11 = vsyncpa [#allocation4], 0
    // Predicated region
    $region2: #{tpu_custom_call.1} parent=1 // pred_check
      _
    $region3: #{tpu_custom_call.1} parent=1 // pred_check_branch
      %13 = sbr.rel (0) target = $region5
    $region4: #{tpu_custom_call.1} parent=1 // pred_region
      _
    $region5: #{tpu_custom_call.1} parent=1 // pred_fallthru
      _
    // Predicated region
    $region6: #{tpu_custom_call.1} parent=1 // pred_check
      _
    $region7: #{tpu_custom_call.1} parent=1 // pred_check_branch
      %15 = sbr.rel (0) target = $region9
    $region8: #{tpu_custom_call.1} parent=1 // pred_region
      _
    $region9: #{tpu_custom_call.1} parent=1 // pred_fallthru
      _
    // Predicated region
    $region10: #{tpu_custom_call.1} parent=1 // pred_check
      _
    $region11: #{tpu_custom_call.1} parent=1 // pred_check_branch
      %17 = sbr.rel (0) target = $region13
    $region12: #{tpu_custom_call.1} parent=1 // pred_region
      _
    $region13: #{tpu_custom_call.1} parent=1 // pred_fallthru
      _
    // Predicated region
    $region14: #{tpu_custom_call.1} parent=1 // pred_check
      _
    $region15: #{tpu_custom_call.1} parent=1 // pred_check_branch
      %19 = sbr.rel (0) target = $region17
    $region16: #{tpu_custom_call.1} parent=1 // pred_region
      _
    $region17: #{tpu_custom_call.1} parent=1 // pred_fallthru
      _
    // Predicated region
    $region18: #{tpu_custom_call.1} parent=1 // pred_check
      _
    $region19: #{tpu_custom_call.1} parent=1 // pred_check_branch
      %21 = sbr.rel (0) target = $region21
    $region20: #{tpu_custom_call.1} parent=1 // pred_region
      _
    $region21: #{tpu_custom_call.1} parent=1 // pred_fallthru
      _
    // Predicated region
    $region22: #{tpu_custom_call.1} parent=1 // pred_check
      _
    $region23: #{tpu_custom_call.1} parent=1 // pred_check_branch
      %23 = sbr.rel (0) target = $region25
    $region24: #{tpu_custom_call.1} parent=1 // pred_region
      _
    $region25: #{tpu_custom_call.1} parent=1 // pred_fallthru
      _
    %p25 = scmp.eq.s32.totalorder 0, 0
    // Predicated region
    $region26: #{tpu_custom_call.1} parent=1 // pred_check
      %p26 = pneg %p25
    $region27: #{tpu_custom_call.1} parent=1 // pred_check_branch
      %28 = sbr.rel (%p26) target = $region29
    $region28: #{tpu_custom_call.1} parent=1 // pred_region
      %v29 = vld [vmem:[%s0] sm:$0xff]
      %v30 = vld [vmem:[%s0 + $0x8] sm:$0xff]
      %vm31 = vcmask 261120
      %v32 = vsel %vm31, %v29, 0.0
      %33 = vadd.xlane.f32.xlu0 %v32
      %v34 = vpop.xlane.xlu0 %33
      %v35 = vsel %vm31, %v30, 0.0
      %36 = vadd.xlane.f32.xlu0 %v35
      %v37 = vpop.xlane.xlu0 %36
      %v38 = vrcp.pop 32.0
      %v39 = vmul.f32 32.0, %v38
      %v40 = vsub.f32 1.0, %v39
      %v41 = vmul.f32 %v38, %v40
      %v42 = vadd.f32 %v38, %v41
      %vm43 = vweird.f32 %v38
      %v44 = vsel %vm43, %v38, %v42
      %v45 = vmul.f32 %v34, %v44
      %v46 = vmul.f32 %v37, %v44
      %v47 = vsub.f32 %v29, %v45
      %v48 = vsub.f32 %v30, %v46
      %v49 = vmul.f32 %v47, %v47
      %v50 = vmul.f32 %v48, %v48
      %v51 = vsel %vm31, %v49, 0.0
      %52 = vadd.xlane.f32.xlu0 %v51
      %v53 = vpop.xlane.xlu0 %52
      %v54 = vsel %vm31, %v50, 0.0
      %55 = vadd.xlane.f32.xlu0 %v54
      %v56 = vpop.xlane.xlu0 %55
      %v57 = vmul.f32 %v53, %v44
      %v58 = vmul.f32 %v56, %v44
      %v59 = vadd.f32 %v57, 1e-05
      %v60 = vadd.f32 %v58, 1e-05
      %v61 = vrsqrt.pop %v59
      %v62 = vmul.f32 %v61, %v59
      %v63 = vmul.f32 %v62, %v61
      %v64 = vmul.f32 0.5, %v63
      %v65 = vsub.f32 1.5, %v64
      %v66 = vmul.f32 %v61, %v65
      %vm67 = vweird.f32 %v59
      %vm68 = vweird.f32 %v61
      %vm69 = vmor %vm67, %vm68
      %v70 = vsel %vm69, %v61, %v66
      %v71 = vrsqrt.pop %v60
      %v72 = vmul.f32 %v71, %v60
      %v73 = vmul.f32 %v72, %v71
      %v74 = vmul.f32 0.5, %v73
      %v75 = vsub.f32 1.5, %v74
      %v76 = vmul.f32 %v71, %v75
      %vm77 = vweird.f32 %v60
      %vm78 = vweird.f32 %v71
      %vm79 = vmor %vm77, %vm78
      %v80 = vsel %vm79, %v71, %v76
      %v81 = vmul.f32 %v47, %v70
      %v82 = vmul.f32 %v48, %v80
      %v83 = vld [vmem:[%s1] sm:$0x1]
      %v85 = vperm.slane %v83, 0
      %v87 = vmul.f32 %v81, %v85
      %v88 = vmul.f32 %v82, %v85
      %v89 = vpack.c.bf16 %v87, %v87
      %v90 = vpack.c.bf16 %v88, %v88
      %vm91 = vcmask 257024
      %92 = vst.msk [vmem:[#allocation2] sm:$0xf] %vm91, %v89
      %93 = vst.msk [vmem:[#allocation2 + $0x4] sm:$0xf] %vm91, %v90
      %94 = vst.msk [vmem:[#allocation3] sm:$0xff] %vm31, 0.0
      %95 = vst.msk [vmem:[#allocation3 + $0x8] sm:$0xff] %vm31, 0.0
    $region29: #{tpu_custom_call.1} parent=1 // pred_fallthru
      _
    %v96 = vld [vmem:[#allocation2] sm:$0xf]
    %v97 = vld [vmem:[#allocation2 + $0x4] sm:$0xf]
    %v98 = vld [vmem:[%s2] sm:$0xf]
    %v99 = vld [vmem:[%s2 + $0x4] sm:$0xf]
    %v100 = vld [vmem:[%s2 + $0x8] sm:$0xf]
    %v101 = vld [vmem:[%s2 + $0xc] sm:$0xf]
    %v102 = vld [vmem:[%s3] sm:$0x1]
    %v104 = vperm.slane %v102, 0
    %v108 = vunpack.c.l.b16 %v96
    %v109 = vunpack.c.l.b16 %v97
    %v110 = vpack.c.b16 %v109, %v108
    %v115 = vunpack.c.l.b16 %v98
    %v116 = vunpack.c.l.b16 %v99
    %v117 = vunpack.c.l.b16 %v100
    %v118 = vunpack.c.l.b16 %v101
    %v119 = vpack.c.b16 %v116, %v115
    %v120 = vpack.c.b16 %v118, %v117
    %vm123 = vcmask 261120
    %v125 = vsel %vm123, %v110, 0
    %127 = vmatpush.bf16.msra.mxu0 0
    %128 = vmatpush.bf16.msra.mxu0 0
    %129 = vmatpush.bf16.msra.mxu0 0
    %130 = vmatpush.bf16.msra.mxu0 0
    %131 = vmatpush.bf16.msra.mxu0 0
    %132 = vmatpush.bf16.msra.mxu0 0
    %133 = vmatpush.bf16.msra.mxu0 %v120
    %134 = vmatpush.bf16.msra.mxu0 %v119
    %135 = vmatmul.bf16.gmra.mxu0 %v125
    %v136 = vpop.f32.mrf.mxu0
    %v137 = vadd.f32 %v104, %v136
    %v138 = vpop.f32.mrf.mxu0
    %v139 = vadd.f32 %v104, %v138
    %140 = vdwg.mxu0
    %v141 = vmul.f32 %v137, 0.044715
    %v142 = vmul.f32 %v139, 0.044715
    %v143 = vmul.f32 %v141, %v137
    %v144 = vmul.f32 %v142, %v139
    %v145 = vmul.f32 %v143, %v137
    %v146 = vmul.f32 %v144, %v139
    %v147 = vadd.f32 %v137, %v145
    %v148 = vadd.f32 %v139, %v146
    %v149 = vmul.f32 %v147, 0.7978846
    %v150 = vmul.f32 %v148, 0.7978846
    %v151 = vmul.f32 %v137, 0.5
    %v152 = vmul.f32 %v139, 0.5
    %v153 = vtanh.pop %v149
    %v154 = vtanh.pop %v150
    %v155 = vadd.f32 %v153, 1.0
    %v156 = vadd.f32 %v154, 1.0
    %v157 = vmul.f32 %v151, %v155
    %v158 = vmul.f32 %v152, %v156
    %v159 = vpack.c.bf16 %v158, %v157
    %v160 = vld [vmem:[#allocation3] sm:$0xff]
    %v161 = vld [vmem:[#allocation3 + $0x8] sm:$0xff]
    %v162 = vld [vmem:[%s4] sm:$0xf]
    %v163 = vld [vmem:[%s4 + $0x4] sm:$0xf]
    %v164 = vld [vmem:[%s4 + $0x8] sm:$0xf]
    %v165 = vld [vmem:[%s4 + $0xc] sm:$0xf]
    %v166 = vld [vmem:[%s4 + $0x10] sm:$0xf]
    %v167 = vld [vmem:[%s4 + $0x14] sm:$0xf]
    %v168 = vld [vmem:[%s4 + $0x18] sm:$0xf]
    %v169 = vld [vmem:[%s4 + $0x1c] sm:$0xf]
    %v170 = vld [vmem:[%s4 + $0x20] sm:$0xf]
    %v171 = vld [vmem:[%s4 + $0x24] sm:$0xf]
    %v172 = vld [vmem:[%s4 + $0x28] sm:$0xf]
    %v173 = vld [vmem:[%s4 + $0x2c] sm:$0xf]
    %v174 = vld [vmem:[%s4 + $0x30] sm:$0xf]
    %v175 = vld [vmem:[%s4 + $0x34] sm:$0xf]
    %v176 = vld [vmem:[%s4 + $0x38] sm:$0xf]
    %v177 = vld [vmem:[%s4 + $0x3c] sm:$0xf]
    %v194 = vunpack.c.l.b16 %v162
    %v195 = vunpack.c.l.b16 %v163
    %v196 = vunpack.c.l.b16 %v164
    %v197 = vunpack.c.l.b16 %v165
    %v198 = vunpack.c.l.b16 %v166
    %v199 = vunpack.c.l.b16 %v167
    %v200 = vunpack.c.l.b16 %v168
    %v201 = vunpack.c.l.b16 %v169
    %v202 = vunpack.c.l.b16 %v170
    %v203 = vunpack.c.l.b16 %v171
    %v204 = vunpack.c.l.b16 %v172
    %v205 = vunpack.c.l.b16 %v173
    %v206 = vunpack.c.l.b16 %v174
    %v207 = vunpack.c.l.b16 %v175
    %v208 = vunpack.c.l.b16 %v176
    %v209 = vunpack.c.l.b16 %v177
    %v210 = vpack.c.b16 %v195, %v194
    %v211 = vpack.c.b16 %v197, %v196
    %v212 = vpack.c.b16 %v199, %v198
    %v213 = vpack.c.b16 %v201, %v200
    %v214 = vpack.c.b16 %v203, %v202
    %v215 = vpack.c.b16 %v205, %v204
    %v216 = vpack.c.b16 %v207, %v206
    %v217 = vpack.c.b16 %v209, %v208
    %226 = vmatpush.bf16.msra.mxu0 %v217
    %227 = vmatpush.bf16.msra.mxu0 %v216
    %228 = vmatpush.bf16.msra.mxu0 %v215
    %229 = vmatpush.bf16.msra.mxu0 %v214
    %230 = vmatpush.bf16.msra.mxu0 %v213
    %231 = vmatpush.bf16.msra.mxu0 %v212
    %232 = vmatpush.bf16.msra.mxu0 %v211
    %233 = vmatpush.bf16.msra.mxu0 %v210
    %234 = vmatmul.bf16.gmra.mxu0 %v159
    %v235 = vpop.f32.mrf.mxu0
    %v236 = vadd.f32 0.0, %v235
    %v237 = vpop.f32.mrf.mxu0
    %v238 = vadd.f32 0.0, %v237
    %239 = vdwg.mxu0
    %v240 = vadd.f32 %v160, %v236
    %v241 = vadd.f32 %v161, %v238
    %242 = vst.msk [vmem:[#allocation3] sm:$0xff] %vm123, %v240
    %243 = vst.msk [vmem:[#allocation3 + $0x8] sm:$0xff] %vm123, %v241
    // Predicated region
    $region30: #{tpu_custom_call.1} parent=1 // pred_check
      %p244 = pneg %p25
    $region31: #{tpu_custom_call.1} parent=1 // pred_check_branch
      %246 = sbr.rel (%p244) target = $region33
    $region32: #{tpu_custom_call.1} parent=1 // pred_region
      %v247 = vld [vmem:[#allocation3] sm:$0xff]
      %v248 = vld [vmem:[#allocation3 + $0x8] sm:$0xff]
      %v249 = vld [vmem:[%s5] sm:$0x1]
      %v251 = vperm.slane %v249, 0
      %v253 = vadd.f32 %v247, %v251
      %v254 = vadd.f32 %v248, %v251
      %255 = vst.msk [vmem:[#allocation3] sm:$0xff] %vm123, %v253
      %256 = vst.msk [vmem:[#allocation3 + $0x8] sm:$0xff] %vm123, %v254
    $region33: #{tpu_custom_call.1} parent=1 // pred_fallthru
      _
    // Predicated region
    $region34: #{tpu_custom_call.1} parent=1 // pred_check
      _
    $region35: #{tpu_custom_call.1} parent=1 // pred_check_branch
      %258 = sbr.rel (0) target = $region37
    $region36: #{tpu_custom_call.1} parent=1 // pred_region
      %260 = vsyncadd [#allocation4], 0
      %s261 = sshll.u32 [#allocation3], 4
      %s262 = int_to_ptr.vmem [resolvable:$true] %s261
      %s263 = sshll.u32 %s6, 4
      %s264 = int_to_ptr.hbm [resolvable:$true] %s263
      %269 = dma.vmem_to_hbm [thread:$0]  %s262, 256, %s264, [#allocation4], 128, 128, 8
    $region37: #{tpu_custom_call.1} parent=1 // pred_fallthru
      _
    // Predicated region
    $region38: #{tpu_custom_call.1} parent=1 // pred_check
      _
    $region39: #{tpu_custom_call.1} parent=1 // pred_check_branch
      %271 = sbr.rel (0) target = $region41
    $region40: #{tpu_custom_call.1} parent=1 // pred_region
      %273 = dma.done [#allocation4], 256
    $region41: #{tpu_custom_call.1} parent=1 // pred_fallthru
      _
    %274 = vsyncpa [#allocation4], 1

</llo_original>
